<compile_context>
chip_gen: v6e
topology: v6e:2x2x1
jax: 0.10.0
libtpu: 0.0.40
codegen_flags: <defaults>
</compile_context>

<pallas_src>
import jax
import jax.numpy as jnp
from jax import lax
from jax.experimental import pallas as pl
from jax.experimental.pallas import tpu as pltpu

BN_EPS = 1e-5


def _round_up(x, m):
    return (x + m - 1) // m * m


# --------------------------------------------------------------------------
# Pallas kernel: one entity tile of   sigmoid(S @ E_tile^T)
# --------------------------------------------------------------------------
def _score_kernel(s_ref, e_ref, out_ref):
    """s_ref: VMEM (Bp, Dp)  e_ref: VMEM (TN, Dp)  out_ref: VMEM (Bp, TN)."""
    score = lax.dot_general(
        s_ref[...], e_ref[...],
        dimension_numbers=(((1,), (1,)), ((), ())),   # contract feature axis
        preferred_element_type=jnp.float32)
    out_ref[...] = jax.nn.sigmoid(score).astype(out_ref.dtype)


# --------------------------------------------------------------------------
# Host-side glue
# --------------------------------------------------------------------------
def _fold_bn(gamma, beta, mean, var):
    """Fold eval-mode BatchNorm1d(2) into per-channel scale/shift."""
    scale = gamma * lax.rsqrt(var + BN_EPS)
    shift = beta - mean * scale
    return scale, shift


def _complex_prepare(head, rel, bn0, bn2, do_batch_norm=True):
    """bn0 -> complex multiply -> bn2; returns S (B, 2D) in [re | im] layout."""
    D = head.shape[1] // 2
    head = head.astype(jnp.float32)
    rel = rel.astype(jnp.float32)
    re_h, im_h = head[:, :D], head[:, D:]
    re_r, im_r = rel[:, :D], rel[:, D:]
    if do_batch_norm:
        s0, b0 = _fold_bn(*bn0)
        re_h = re_h * s0[0] + b0[0]
        im_h = im_h * s0[1] + b0[1]
    re_s = re_h * re_r - im_h * im_r
    im_s = re_h * im_r + im_h * re_r
    if do_batch_norm:
        s2, b2 = _fold_bn(*bn2)
        re_s = re_s * s2[0] + b2[0]
        im_s = im_s * s2[1] + b2[1]
    return jnp.concatenate([re_s, im_s], axis=1)   # (B, 2D)


def prepare_entity_table(E_weight, store_dtype=jnp.bfloat16):
    """One-time prep of the entity table (do at model-load time, NOT per call):
    cast to a compact MXU-native dtype and zero-pad the feature axis to a
    128-lane multiple for unmasked, contiguous streaming."""
    _, ed = E_weight.shape
    ed_pad = _round_up(ed, 128)
    E_p = E_weight.astype(store_dtype)
    if ed_pad != ed:
        E_p = jnp.pad(E_p, ((0, 0), (0, ed_pad - ed)))
    return E_p


def kge_complex_forward(e1_idx, r_idx, E_prepared, R_weight, bn0, bn2,
                        entity_dim, *, block_n=2048,
                        vmem_budget=20 * 1024 * 1024,
                        do_batch_norm=True, out_dtype=jnp.float32):
    """Full KGE.forward (ComplEx, eval mode).

    E_prepared: output of prepare_entity_table (padded / compact-dtype table).
    entity_dim: original (unpadded) 2*ent_vec_dim feature width.
    Returns sigmoid scores of shape (B, N_ent) in `out_dtype`.
    """
    B = e1_idx.shape[0]
    N_ent, ed_pad = E_prepared.shape
    itemsize = jnp.dtype(E_prepared.dtype).itemsize
    out_itemsize = jnp.dtype(out_dtype).itemsize

    # ---- Embedding lookups + per-query elementwise prep (tiny (B, 2D)) ----
    head = E_prepared[e1_idx, :entity_dim]        # (B, 2D), padded cols dropped
    rel = R_weight[r_idx]                         # (B, 2D)
    S = _complex_prepare(head, rel, bn0, bn2, do_batch_norm)

    # Pad queries to a sublane-friendly multiple of 16 and the feature axis to
    # the padded table width; cast to the table dtype (bf16 -> native MXU rate).
    B_pad = _round_up(max(B, 8), 16)
    S = jnp.pad(S, ((0, B_pad - B), (0, ed_pad - entity_dim)))
    S = S.astype(E_prepared.dtype)

    # ---- Entity tile size: large, VMEM-budgeted, megacore-balanced ----
    max_bn = max(128, (vmem_budget // (2 * ed_pad * itemsize)) // 128 * 128)
    block_n = min(block_n, max_bn, _round_up(N_ent, 128))
    # Keep grid_n >= 8 so v7x's two TensorCores load-balance the parallel axis.
    min_grid = 8
    if pl.cdiv(N_ent, block_n) < min_grid:
        block_n = max(128, _round_up(pl.cdiv(N_ent, min_grid), 128))
    grid_n = pl.cdiv(N_ent, block_n)

    # Explicit scoped-VMEM limit from the real tile accounting (E double-buffer
    # + resident S + double-buffered output tile), with headroom; clamped so it
    # lifts v5e's 16 MiB default but stays inside v7x's 64 MiB physical VMEM.
    e_bytes = 2 * block_n * ed_pad * itemsize
    s_bytes = 2 * B_pad * ed_pad * itemsize
    o_bytes = 2 * B_pad * block_n * out_itemsize
    vmem_limit = int(min(max(2 * (e_bytes + s_bytes + o_bytes) + (4 << 20),
                             32 << 20),
                         64 << 20))

    cost = pl.CostEstimate(
        flops=2 * B_pad * ed_pad * N_ent,
        transcendentals=B_pad * N_ent,
        bytes_accessed=(N_ent * ed_pad * itemsize
                        + B_pad * ed_pad * itemsize
                        + B_pad * N_ent * out_itemsize))

    out = pl.pallas_call(
        _score_kernel,
        out_shape=jax.ShapeDtypeStruct((B_pad, N_ent), out_dtype),
        grid_spec=pltpu.PrefetchScalarGridSpec(
            num_scalar_prefetch=0,
            grid=(grid_n,),
            in_specs=[
                # S: same block every step -> stays resident in VMEM.
                pl.BlockSpec((B_pad, ed_pad), lambda n: (0, 0)),
                # Streamed, lane-dense entity tile.
                pl.BlockSpec((block_n, ed_pad), lambda n: (n, 0)),
            ],
            out_specs=pl.BlockSpec((B_pad, block_n), lambda n: (0, n)),
        ),
        compiler_params=pltpu.CompilerParams(
            dimension_semantics=("parallel",),    # shard entity loop over TCs
            vmem_limit_bytes=vmem_limit),
        cost_estimate=cost,
    )(S, E_prepared)
    return out[:B]


# --------------------------------------------------------------------------
# Pure-JAX references
# --------------------------------------------------------------------------
def kge_complex_reference(e1_idx, r_idx, E_weight, R_weight, bn0, bn2,
                          do_batch_norm=True, store_dtype=None):
    """Mirrors the PyTorch ComplEx branch (eval mode). If store_dtype is given,
    the E table and the prepared S are routed through that dtype, mirroring
    the kernel's storage/compute path (f32 accumulation)."""
    if store_dtype is not None:
        E_weight = E_weight.astype(store_dtype)
    Ef = E_weight.astype(jnp.float32)
    D = Ef.shape[1] // 2
    head = Ef[e1_idx]
    rel = R_weight[r_idx].astype(jnp.float32)
    S = _complex_prepare(head, rel, bn0, bn2, do_batch_norm)
    if store_dtype is not None:
        S = S.astype(store_dtype).astype(jnp.float32)
    score = jnp.dot(S, Ef.T, preferred_element_type=jnp.float32)
    return jax.nn.sigmoid(score)


if __name__ == "__main__":
    key = jax.random.PRNGKey(0)
    (k_e, k_r, k_idx1, k_idx2, k_g0, k_b0, k_m0, k_g2, k_b2, k_m2) = \
        jax.random.split(key, 10)

    N_ENT, N_REL = 2048, 16
    ENT_VEC_DIM = 32                 # ComplEx multiplier = 2 -> entity_dim = 64
    ENTITY_DIM = 2 * ENT_VEC_DIM
    B = 16

    # xavier_normal-style deterministic init; padding_idx=0 rows set to zero.
    E_w = jax.random.normal(k_e, (N_ENT, ENTITY_DIM), jnp.float32) * 0.08
    R_w = jax.random.normal(k_r, (N_REL, ENTITY_DIM), jnp.float32) * 0.08
    E_w = E_w.at[0].set(0.0)
    R_w = R_w.at[0].set(0.0)

    # BatchNorm1d(2) parameters (gamma, beta, running_mean, running_var).
    bn0 = (1.0 + 0.1 * jax.random.normal(k_g0, (2,), jnp.float32),
           0.1 * jax.random.normal(k_b0, (2,), jnp.float32),
           0.1 * jax.random.normal(k_m0, (2,), jnp.float32),
           jnp.array([1.1, 0.9], jnp.float32))
    bn2 = (1.0 + 0.1 * jax.random.normal(k_g2, (2,), jnp.float32),
           0.1 * jax.random.normal(k_b2, (2,), jnp.float32),
           0.1 * jax.random.normal(k_m2, (2,), jnp.float32),
           jnp.array([0.95, 1.05], jnp.float32))

    e1_idx = jax.random.randint(k_idx1, (B,), 1, N_ENT)
    r_idx = jax.random.randint(k_idx2, (B,), 1, N_REL)

    # One-time table prep (bf16 storage, 128-lane padded feature axis).
    E_prep = prepare_entity_table(E_w, store_dtype=jnp.bfloat16)

    pred = kge_complex_forward(e1_idx, r_idx, E_prep, R_w, bn0, bn2,
                               entity_dim=ENTITY_DIM)
    pred = jax.block_until_ready(pred)
    assert pred.shape == (B, N_ENT)

    # Strict check against a reference that mirrors the bf16 storage path.
    ref_bf16 = kge_complex_reference(e1_idx, r_idx, E_w, R_w, bn0, bn2,
                                     store_dtype=jnp.bfloat16)
    err = jnp.max(jnp.abs(pred - ref_bf16))
    assert jnp.allclose(pred, ref_bf16, atol=1e-4, rtol=1e-3), \
        f"max abs err vs bf16-path reference: {err}"

    # Loose sanity check against the full-f32 reference (bf16 storage error).
    ref_f32 = kge_complex_reference(e1_idx, r_idx, E_w, R_w, bn0, bn2)
    assert jnp.allclose(pred, ref_f32, atol=5e-3, rtol=5e-2), \
        f"max abs err vs f32 reference: {jnp.max(jnp.abs(pred - ref_f32))}"

    print("KERNEL_OK")
</pallas_src>

<mosaic_0001>
module attributes {stable_mosaic.version = 11 : i64} {
  func.func @_score_kernel(%arg0: i32, %arg1: memref<16x128xbf16, #tpu.memory_space<vmem>>, %arg2: memref<256x128xbf16, #tpu.memory_space<vmem>>, %arg3: memref<16x256xf32, #tpu.memory_space<vmem>>) attributes {dimension_semantics = [#tpu.dimension_semantics<parallel>], iteration_bounds = array<i64: 8>, scalar_prefetch = 0 : i64, scratch_operands = 0 : i64, tpu.core_type = #tpu.core_type<tc>, window_params = [{pipeline_mode = #tpu.pipeline_mode<synchronous>, transform_indices = @transform_0, window_bounds = array<i64: 16, 128>}, {transform_indices = @transform_1, window_bounds = array<i64: 256, 128>}, {transform_indices = @transform_2, window_bounds = array<i64: 16, 256>}]} {
    %c0 = arith.constant 0 : index
    %c0_0 = arith.constant 0 : index
    %0 = vector.load %arg1[%c0, %c0_0] : memref<16x128xbf16, #tpu.memory_space<vmem>>, vector<16x128xbf16>
    %c0_1 = arith.constant 0 : index
    %c0_2 = arith.constant 0 : index
    %1 = vector.load %arg2[%c0_1, %c0_2] : memref<256x128xbf16, #tpu.memory_space<vmem>>, vector<256x128xbf16>
    %cst = arith.constant dense<0.000000e+00> : vector<16x256xf32>
    %2 = tpu.matmul %0, %1, %cst {dimension_numbers = #tpu.dot_dimension_numbers<[1], [1], [0], [0], [0, 0, 1, 0], [], []>} : vector<16x128xbf16>, vector<256x128xbf16>, vector<16x256xf32> -> vector<16x256xf32>
    %3 = arith.negf %2 : vector<16x256xf32>
    %4 = math.exp %3 : vector<16x256xf32>
    %cst_3 = arith.constant 1.000000e+00 : f32
    %5 = vector.broadcast %cst_3 : f32 to vector<16x256xf32>
    %6 = arith.addf %5, %4 : vector<16x256xf32>
    %7 = arith.divf %5, %6 : vector<16x256xf32>
    %c0_4 = arith.constant 0 : index
    %c0_5 = arith.constant 0 : index
    %8 = vector.load %arg3[%c0_4, %c0_5] : memref<16x256xf32, #tpu.memory_space<vmem>>, vector<16x256xf32>
    tpu.vector_store %arg3[%c0_4, %c0_5], %7 {strides = array<i32>} : memref<16x256xf32, #tpu.memory_space<vmem>>, vector<16x256xf32>,
    return
  }
  func.func @transform_0(%arg0: i32) -> (i32, i32) {
    %c0_i32 = arith.constant 0 : i32
    %c0_i32_0 = arith.constant 0 : i32
    %c0_i32_1 = arith.constant 0 : i32
    return %c0_i32, %c0_i32_0 : i32, i32
  }
  func.func @transform_1(%arg0: i32) -> (i32, i32) {
    %c0_i32 = arith.constant 0 : i32
    %c0_i32_0 = arith.constant 0 : i32
    return %arg0, %c0_i32 : i32, i32
  }
  func.func @transform_2(%arg0: i32) -> (i32, i32) {
    %c0_i32 = arith.constant 0 : i32
    %c0_i32_0 = arith.constant 0 : i32
    return %c0_i32, %arg0 : i32, i32
  }
}

</mosaic_0001>

<llo_original>
// kernel: tpu_custom_call.1
$region0: #{tpu_custom_call.1}
  #allocation0 [shape = 'u32[]', space=smem, size = 0x4, offset = 0x4, fixed_abs, tag = 'smem constant byte address 0x4 - core index']
  #allocation1 [shape = 'u32[144,128]{1,0:T(1,128)}', space=vmem, size = 0x12000, scoped, tag = 'internal scratch']
  %s0 = inlined_call_operand.hbm [shape: bf16[16,128], index: 0, kind: input, shape index: {}]
  %s1 = inlined_call_operand.hbm [shape: bf16[2048,128], index: 1, kind: input, shape index: {}]
  %s2 = inlined_call_operand.hbm [shape: f32[16,2048], index: 2, kind: output, shape index: {}]
  %s3 = sld [smem:[#allocation0]]
  $region49: #{tpu_custom_call.1} parent=0
    _
  %s5 = ssub.s32 1, %s3
  %s6 = scalar_select 0, %s5, %s3
  $region1: #{tpu_custom_call.1} parent=0
    #allocation2 [shape = 'u8[4096]{0}', space=vmem, size = 0x1000, scoped, tag = 'input window, operand 0, single buffered']
    #allocation3 [shape = 's32[2]{0}', space=sflag, size = 0x8, scoped, tag = 'scoped memory for tpu_custom_call.1']
    #allocation4 [shape = 's32[2]{0}', space=sflag, size = 0x8, scoped, tag = 'scoped memory for tpu_custom_call.1']
    #allocation5 [shape = 'u8[131072]{0}', space=vmem, size = 0x20000, scoped, tag = 'input window, operand 1']
    #allocation6 [shape = 's32[2]{0}', space=sflag, size = 0x8, scoped, tag = 'scoped memory for tpu_custom_call.1']
    #allocation7 [shape = 'u8[32768]{0}', space=vmem, size = 0x8000, scoped, tag = 'output window, operand 0']
    %7 = vsyncpa [#allocation3], 0
    %8 = vsyncpa [#allocation6], 0
    %s9 = scalar_lea.sflag [#allocation6], 1
    %10 = vsyncpa %s9, 0
    %11 = vsyncpa [#allocation4], 0
    %s12 = scalar_lea.sflag [#allocation4], 1
    %13 = vsyncpa %s12, 0
    loop: start=0, step=1, limit=10
    $region2: #{tpu_custom_call.1} parent=1 // loop_pre_header
      _
    $region3: #{tpu_custom_call.1} parent=1 // loop_header
      %s15 = sphi 0, %s19
      %p16 = scmp.ge.s32.totalorder %s15, 10
      %s23 = sphi 0, %s23
      %s25 = sphi 0, %s23
      %s26 = sphi 0, %s25
      %s40 = sphi 0, %s26
      %s46 = sphi 0, %s48
      %s49 = sphi 0, %s46
      %s50 = sphi 0, %s49
      %s66 = sphi 0, %s50
      %s72 = sphi 0, %s74
      %s75 = sphi 0, %s72
      %s76 = sphi 0, %s75
      %s92 = sphi 0, %s76
    $region4: #{tpu_custom_call.1} parent=1 // loop_header_branch
      %18 = sbr.rel (%p16) target = $region8
    $region5: #{tpu_custom_call.1} parent=1 // loop_body
      %s20 = ssub.s32 %s15, 1
      %s21 = ssub.s32 %s15, 2
      %s22 = sadd.s32 %s15, 1
      %s24 = sadd.s32 %s23, 1
      %p27 = scmp.eq.s32.totalorder %s15, 7
      %p28 = scmp.ne.s32.totalorder %s23, %s25
      %p29 = scmp.eq.s32.totalorder %s15, 0
      %p30 = por %p28, %p29
      %p31 = scmp.ne.s32.totalorder %s23, %s25
      %p32 = scmp.eq.s32.totalorder %s20, 7
      %p33 = por %p31, %p32
      %p34 = scmp.ne.s32.totalorder %s25, %s26
      %p35 = scmp.eq.s32.totalorder %s20, 0
      %p36 = por %p34, %p35
      %p37 = scmp.ne.s32.totalorder %s25, %s26
      %p38 = scmp.eq.s32.totalorder %s21, 7
      %p39 = por %p37, %p38
      %p41 = scmp.ne.s32.totalorder %s26, %s40
      %p42 = scmp.eq.s32.totalorder %s21, 0
      %p43 = por %p41, %p42
      %s44 = ssub.s32 %s15, %s22
      %p45 = scmp.eq.s32.totalorder %s44, 0
      %s47 = sadd.s32 %s46, 1
      %s48 = scalar_select %p45, %s46, %s47
      %p51 = pneg %p45
      %p52 = scmp.eq.s32.totalorder %s15, 7
      %p53 = por %p51, %p52
      %p54 = scmp.ne.s32.totalorder %s46, %s49
      %p55 = scmp.eq.s32.totalorder %s15, 0
      %p56 = por %p54, %p55
      %p57 = scmp.ne.s32.totalorder %s46, %s49
      %p58 = scmp.eq.s32.totalorder %s20, 7
      %p59 = por %p57, %p58
      %p60 = scmp.ne.s32.totalorder %s49, %s50
      %p61 = scmp.eq.s32.totalorder %s20, 0
      %p62 = por %p60, %p61
      %p63 = scmp.ne.s32.totalorder %s49, %s50
      %p64 = scmp.eq.s32.totalorder %s21, 7
      %p65 = por %p63, %p64
      %p67 = scmp.ne.s32.totalorder %s50, %s66
      %p68 = scmp.eq.s32.totalorder %s21, 0
      %p69 = por %p67, %p68
      %s70 = ssub.s32 %s15, %s22
      %p71 = scmp.eq.s32.totalorder %s70, 0
      %s73 = sadd.s32 %s72, 1
      %s74 = scalar_select %p71, %s72, %s73
      %p77 = pneg %p71
      %p78 = scmp.eq.s32.totalorder %s15, 7
      %p79 = por %p77, %p78
      %p80 = scmp.ne.s32.totalorder %s72, %s75
      %p81 = scmp.eq.s32.totalorder %s15, 0
      %p82 = por %p80, %p81
      %p83 = scmp.ne.s32.totalorder %s72, %s75
      %p84 = scmp.eq.s32.totalorder %s20, 7
      %p85 = por %p83, %p84
      %p86 = scmp.ne.s32.totalorder %s75, %s76
      %p87 = scmp.eq.s32.totalorder %s20, 0
      %p88 = por %p86, %p87
      %p89 = scmp.ne.s32.totalorder %s75, %s76
      %p90 = scmp.eq.s32.totalorder %s21, 7
      %p91 = por %p89, %p90
      %p93 = scmp.ne.s32.totalorder %s76, %s92
      %p94 = scmp.eq.s32.totalorder %s21, 0
      %p95 = por %p93, %p94
      %p96 = scmp.le.s32.totalorder 1, %s15
      %p97 = scmp.lt.s32.totalorder %s15, 9
      %p98 = pnand %p96, %p97
      %p99 = pneg %p98
      // Predicated region
      $region9: #{tpu_custom_call.1} parent=5 // pred_check
        _
      $region10: #{tpu_custom_call.1} parent=5 // pred_check_branch
        %101 = sbr.rel (%p98) target = $region12
      $region11: #{tpu_custom_call.1} parent=5 // pred_region
        %s102 = ssub.s32 %s15, 1
        // Predicated region
        $region13: #{tpu_custom_call.1} parent=11 // pred_check
          %p103 = pneg %p36
        $region14: #{tpu_custom_call.1} parent=11 // pred_check_branch
          %105 = sbr.rel (%p103) target = $region16
        $region15: #{tpu_custom_call.1} parent=11 // pred_region
          %s107 = ssub.s32 128, 128
          %108 = vsyncadd [#allocation3], %s107
          %s109 = sshll.u32 [#allocation2], 4
          %s110 = int_to_ptr.vmem [resolvable:$true] %s109
          %115 = dma.hbm_to_vmem [thread:$0]  %s0, 128, %s110, [#allocation3], 64, 64, 4
        $region16: #{tpu_custom_call.1} parent=11 // pred_fallthru
          _
      $region12: #{tpu_custom_call.1} parent=5 // pred_fallthru
        _
      %p116 = scmp.lt.s32.totalorder %s15, 8
      // Predicated region
      $region17: #{tpu_custom_call.1} parent=5 // pred_check
        %p117 = pneg %p116
      $region18: #{tpu_custom_call.1} parent=5 // pred_check_branch
        %119 = sbr.rel (%p117) target = $region20
      $region19: #{tpu_custom_call.1} parent=5 // pred_region
        // Predicated region
        $region21: #{tpu_custom_call.1} parent=19 // pred_check
          %p120 = pneg %p56
        $region22: #{tpu_custom_call.1} parent=19 // pred_check_branch
          %122 = sbr.rel (%p120) target = $region24
        $region23: #{tpu_custom_call.1} parent=19 // pred_region
          %s123 = sand.u32 %s46, 1
          %s124 = scalar_lea.sflag [#allocation6], %s123
          %s125 = sand.u32 %s46, 1
          %s126 = smul.addr %s125, 128
          %s127 = scalar_lea.vmem [#allocation5], %s126
          %s128 = smul.u32 32, %s15
          %s130 = ssub.s32 2048, 2048
          %131 = vsyncadd %s124, %s130
          %s132 = smul.addr %s128, 64
          %s133 = scalar_lea.hbm %s1, %s132
          %s134 = sshll.u32 %s127, 4
          %s135 = int_to_ptr.vmem [resolvable:$true] %s134
          %140 = dma.hbm_to_vmem [thread:$0]  %s133, 2048, %s135, %s124, 64, 64, 4
        $region24: #{tpu_custom_call.1} parent=19 // pred_fallthru
          _
      $region20: #{tpu_custom_call.1} parent=5 // pred_fallthru
        _
      %p141 = scmp.le.s32.totalorder 1, %s15
      %p142 = scmp.lt.s32.totalorder %s15, 9
      %p143 = pnand %p141, %p142
      %p144 = pneg %p143
      // Predicated region
      $region25: #{tpu_custom_call.1} parent=5 // pred_check
        _
      $region26: #{tpu_custom_call.1} parent=5 // pred_check_branch
        %146 = sbr.rel (%p143) target = $region28
      $region27: #{tpu_custom_call.1} parent=5 // pred_region
        %s147 = ssub.s32 %s15, 1
        // Predicated region
        $region29: #{tpu_custom_call.1} parent=27 // pred_check
          %p148 = pneg %p36
        $region30: #{tpu_custom_call.1} parent=27 // pred_check_branch
          %150 = sbr.rel (%p148) target = $region32
        $region31: #{tpu_custom_call.1} parent=27 // pred_region
          %151 = dma.done [#allocation3], 128
        $region32: #{tpu_custom_call.1} parent=27 // pred_fallthru
          _
        %s152 = sand.u32 %s49, 1
        %s153 = scalar_lea.sflag [#allocation6], %s152
        %s154 = sand.u32 %s49, 1
        %s155 = smul.addr %s154, 128
        %s156 = scalar_lea.vmem [#allocation5], %s155
        // Predicated region
        $region33: #{tpu_custom_call.1} parent=27 // pred_check
          %p157 = pneg %p62
        $region34: #{tpu_custom_call.1} parent=27 // pred_check_branch
          %159 = sbr.rel (%p157) target = $region36
        $region35: #{tpu_custom_call.1} parent=27 // pred_region
          %160 = dma.done %s153, 2048
        $region36: #{tpu_custom_call.1} parent=27 // pred_fallthru
          _
        %p161 = pneg %p36
        %p162 = pneg %p33
        %s163 = sand.u32 %s49, 1
        %s164 = scalar_lea.sflag [#allocation6], %s163
        %s165 = sand.u32 %s49, 1
        %s166 = smul.addr %s165, 128
        %s167 = scalar_lea.vmem [#allocation5], %s166
        %p168 = pneg %p62
        %p169 = pneg %p59
        %p170 = pneg %p88
        %p171 = pneg %p85
        %s172 = sand.u32 %s75, 1
        %s173 = scalar_lea.sflag [#allocation4], %s172
        %s174 = sand.u32 %s75, 1
        %s175 = smul.addr %s174, 32
        %s176 = scalar_lea.vmem [#allocation7], %s175
        %s177 = smul.u32 32, %s20
        %s178 = smul.u32 2, %s20
        %v180 = vld [vmem:[#allocation2] sm:$0xf]
        %v181 = vld [vmem:[#allocation2 + $0x4] sm:$0xf]
        %v182 = vld [vmem:[%s156] sm:$0xf]
        %v183 = vld [vmem:[%s156 + $0x4] sm:$0xf]
        %v184 = vld [vmem:[%s156 + $0x8] sm:$0xf]
        %v185 = vld [vmem:[%s156 + $0xc] sm:$0xf]
        %v186 = vld [vmem:[%s156 + $0x10] sm:$0xf]
        %v187 = vld [vmem:[%s156 + $0x14] sm:$0xf]
        %v188 = vld [vmem:[%s156 + $0x18] sm:$0xf]
        %v189 = vld [vmem:[%s156 + $0x1c] sm:$0xf]
        %v190 = vld [vmem:[%s156 + $0x20] sm:$0xf]
        %v191 = vld [vmem:[%s156 + $0x24] sm:$0xf]
        %v192 = vld [vmem:[%s156 + $0x28] sm:$0xf]
        %v193 = vld [vmem:[%s156 + $0x2c] sm:$0xf]
        %v194 = vld [vmem:[%s156 + $0x30] sm:$0xf]
        %v195 = vld [vmem:[%s156 + $0x34] sm:$0xf]
        %v196 = vld [vmem:[%s156 + $0x38] sm:$0xf]
        %v197 = vld [vmem:[%s156 + $0x3c] sm:$0xf]
        %v198 = vld [vmem:[%s156 + $0x40] sm:$0xf]
        %v199 = vld [vmem:[%s156 + $0x44] sm:$0xf]
        %v200 = vld [vmem:[%s156 + $0x48] sm:$0xf]
        %v201 = vld [vmem:[%s156 + $0x4c] sm:$0xf]
        %v202 = vld [vmem:[%s156 + $0x50] sm:$0xf]
        %v203 = vld [vmem:[%s156 + $0x54] sm:$0xf]
        %v204 = vld [vmem:[%s156 + $0x58] sm:$0xf]
        %v205 = vld [vmem:[%s156 + $0x5c] sm:$0xf]
        %v206 = vld [vmem:[%s156 + $0x60] sm:$0xf]
        %v207 = vld [vmem:[%s156 + $0x64] sm:$0xf]
        %v208 = vld [vmem:[%s156 + $0x68] sm:$0xf]
        %v209 = vld [vmem:[%s156 + $0x6c] sm:$0xf]
        %v210 = vld [vmem:[%s156 + $0x70] sm:$0xf]
        %v211 = vld [vmem:[%s156 + $0x74] sm:$0xf]
        %v212 = vld [vmem:[%s156 + $0x78] sm:$0xf]
        %v213 = vld [vmem:[%s156 + $0x7c] sm:$0xf]
        %v216 = vunpack.c.l.b16 %v180
        %v217 = vunpack.c.l.b16 %v181
        %v218 = vpack.c.b16 %v217, %v216
        %v252 = vunpack.c.l.b16 %v182
        %v253 = vunpack.c.l.b16 %v183
        %v254 = vunpack.c.l.b16 %v184
        %v255 = vunpack.c.l.b16 %v185
        %v256 = vunpack.c.l.b16 %v186
        %v257 = vunpack.c.l.b16 %v187
        %v258 = vunpack.c.l.b16 %v188
        %v259 = vunpack.c.l.b16 %v189
        %v260 = vunpack.c.l.b16 %v190
        %v261 = vunpack.c.l.b16 %v191
        %v262 = vunpack.c.l.b16 %v192
        %v263 = vunpack.c.l.b16 %v193
        %v264 = vunpack.c.l.b16 %v194
        %v265 = vunpack.c.l.b16 %v195
        %v266 = vunpack.c.l.b16 %v196
        %v267 = vunpack.c.l.b16 %v197
        %v268 = vunpack.c.l.b16 %v198
        %v269 = vunpack.c.l.b16 %v199
        %v270 = vunpack.c.l.b16 %v200
        %v271 = vunpack.c.l.b16 %v201
        %v272 = vunpack.c.l.b16 %v202
        %v273 = vunpack.c.l.b16 %v203
        %v274 = vunpack.c.l.b16 %v204
        %v275 = vunpack.c.l.b16 %v205
        %v276 = vunpack.c.l.b16 %v206
        %v277 = vunpack.c.l.b16 %v207
        %v278 = vunpack.c.l.b16 %v208
        %v279 = vunpack.c.l.b16 %v209
        %v280 = vunpack.c.l.b16 %v210
        %v281 = vunpack.c.l.b16 %v211
        %v282 = vunpack.c.l.b16 %v212
        %v283 = vunpack.c.l.b16 %v213
        %v284 = vpack.c.b16 %v253, %v252
        %v285 = vpack.c.b16 %v255, %v254
        %v286 = vpack.c.b16 %v257, %v256
        %v287 = vpack.c.b16 %v259, %v258
        %v288 = vpack.c.b16 %v261, %v260
        %v289 = vpack.c.b16 %v263, %v262
        %v290 = vpack.c.b16 %v265, %v264
        %v291 = vpack.c.b16 %v267, %v266
        %v292 = vpack.c.b16 %v269, %v268
        %v293 = vpack.c.b16 %v271, %v270
        %v294 = vpack.c.b16 %v273, %v272
        %v295 = vpack.c.b16 %v275, %v274
        %v296 = vpack.c.b16 %v277, %v276
        %v297 = vpack.c.b16 %v279, %v278
        %v298 = vpack.c.b16 %v281, %v280
        %v299 = vpack.c.b16 %v283, %v282
        %316 = vmatprep.subr.bf16.mxu0 0
        %317 = vmatpush1.bf16.xpose.msra.mxu0 %v291
        %318 = vmatprep.subr.bf16.mxu0 0
        %319 = vmatpush1.bf16.xpose.msra.mxu0 %v290
        %320 = vmatprep.subr.bf16.mxu0 0
        %321 = vmatpush1.bf16.xpose.msra.mxu0 %v289
        %322 = vmatprep.subr.bf16.mxu0 0
        %323 = vmatpush1.bf16.xpose.msra.mxu0 %v288
        %324 = vmatprep.subr.bf16.mxu0 0
        %325 = vmatpush1.bf16.xpose.msra.mxu0 %v287
        %326 = vmatprep.subr.bf16.mxu0 0
        %327 = vmatpush1.bf16.xpose.msra.mxu0 %v286
        %328 = vmatprep.subr.bf16.mxu0 0
        %329 = vmatpush1.bf16.xpose.msra.mxu0 %v285
        %330 = vmatprep.subr.bf16.mxu0 0
        %331 = vmatpush1.bf16.xpose.msra.mxu0 %v284
        %332 = vmatprep.subr.bf16.mxu0 0
        %333 = vmatpush2.bf16.xpose.msra.mxu0 %v299
        %334 = vmatprep.subr.bf16.mxu0 0
        %335 = vmatpush2.bf16.xpose.msra.mxu0 %v298
        %336 = vmatprep.subr.bf16.mxu0 0
        %337 = vmatpush2.bf16.xpose.msra.mxu0 %v297
        %338 = vmatprep.subr.bf16.mxu0 0
        %339 = vmatpush2.bf16.xpose.msra.mxu0 %v296
        %340 = vmatprep.subr.bf16.mxu0 0
        %341 = vmatpush2.bf16.xpose.msra.mxu0 %v295
        %342 = vmatprep.subr.bf16.mxu0 0
        %343 = vmatpush2.bf16.xpose.msra.mxu0 %v294
        %344 = vmatprep.subr.bf16.mxu0 0
        %345 = vmatpush2.bf16.xpose.msra.mxu0 %v293
        %346 = vmatprep.subr.bf16.mxu0 0
        %347 = vmatpush2.bf16.xpose.msra.mxu0 %v292
        %348 = vmatprep.mubr.bf16.mxu0 0
        %349 = vmatmul.mubr.bf16.gmra.mxu0 %v218
        %v350 = vpop.f32.mrf.mxu0
        %v351 = vadd.f32 0.0, %v350
        %v352 = vpop.f32.mrf.mxu0
        %v353 = vadd.f32 0.0, %v352
        %v354 = vpop.f32.mrf.mxu0
        %v355 = vadd.f32 0.0, %v354
        %v356 = vpop.f32.mrf.mxu0
        %v357 = vadd.f32 0.0, %v356
        %358 = vdwg.mxu0
        %v359 = vxor.u32 %v351, 2147483648
        %v360 = vxor.u32 %v353, 2147483648
        %v361 = vxor.u32 %v355, 2147483648
        %v362 = vxor.u32 %v357, 2147483648
        %v363 = vmul.f32 %v359, 1.442695
        %v364 = vpow.pop %v363
        %v365 = vmul.f32 %v360, 1.442695
        %v366 = vpow.pop %v365
        %v367 = vmul.f32 %v361, 1.442695
        %v368 = vpow.pop %v367
        %v369 = vmul.f32 %v362, 1.442695
        %v370 = vpow.pop %v369
        %v371 = vadd.f32 %v364, 1.0
        %v372 = vadd.f32 %v366, 1.0
        %v373 = vadd.f32 %v368, 1.0
        %v374 = vadd.f32 %v370, 1.0
        %v375 = vrcp.pop %v371
        %v376 = vmul.f32 1.0, %v375
        %v377 = vrcp.pop %v372
        %v378 = vmul.f32 1.0, %v377
        %v379 = vrcp.pop %v373
        %v380 = vmul.f32 1.0, %v379
        %v381 = vrcp.pop %v374
        %v382 = vmul.f32 1.0, %v381
        %383 = vst [vmem:[%s176] sm:$0xff] %v376
        %384 = vst [vmem:[%s176 + $0x8] sm:$0xff] %v378
        %385 = vst [vmem:[%s176 + $0x10] sm:$0xff] %v380
        %386 = vst [vmem:[%s176 + $0x18] sm:$0xff] %v382
        %s387 = sand.u32 %s75, 1
        %s388 = scalar_lea.sflag [#allocation4], %s387
        %s389 = sand.u32 %s75, 1
        %s390 = smul.addr %s389, 32
        %s391 = scalar_lea.vmem [#allocation7], %s390
        // Predicated region
        $region37: #{tpu_custom_call.1} parent=27 // pred_check
          %p392 = pneg %p85
        $region38: #{tpu_custom_call.1} parent=27 // pred_check_branch
          %394 = sbr.rel (%p392) target = $region40
        $region39: #{tpu_custom_call.1} parent=27 // pred_region
          %s395 = smul.u32 2, %s20
          %s397 = ssub.s32 512, 512
          %398 = vsyncadd %s388, %s397
          %s399 = smul.addr %s395, 128
          %s400 = scalar_lea.hbm %s2, %s399
          %s401 = sshll.u32 %s391, 4
          %s402 = int_to_ptr.vmem [resolvable:$true] %s401
          %407 = dma.vmem_to_hbm [thread:$0]  %s402, 512, %s400, %s388, 256, 2048, 16
        $region40: #{tpu_custom_call.1} parent=27 // pred_fallthru
          _
      $region28: #{tpu_custom_call.1} parent=5 // pred_fallthru
        _
      %p408 = scmp.le.s32.totalorder 2, %s15
      // Predicated region
      $region41: #{tpu_custom_call.1} parent=5 // pred_check
        %p409 = pneg %p408
      $region42: #{tpu_custom_call.1} parent=5 // pred_check_branch
        %411 = sbr.rel (%p409) target = $region44
      $region43: #{tpu_custom_call.1} parent=5 // pred_region
        %s412 = ssub.s32 %s15, 2
        // Predicated region
        $region45: #{tpu_custom_call.1} parent=43 // pred_check
          %p413 = pneg %p91
        $region46: #{tpu_custom_call.1} parent=43 // pred_check_branch
          %415 = sbr.rel (%p413) target = $region48
        $region47: #{tpu_custom_call.1} parent=43 // pred_region
          %s416 = sand.u32 %s76, 1
          %s417 = scalar_lea.sflag [#allocation4], %s416
          %s418 = sand.u32 %s76, 1
          %s419 = smul.addr %s418, 32
          %s420 = scalar_lea.vmem [#allocation7], %s419
          %421 = dma.done %s417, 512
        $region48: #{tpu_custom_call.1} parent=43 // pred_fallthru
          _
      $region44: #{tpu_custom_call.1} parent=5 // pred_fallthru
        _
    $region6: #{tpu_custom_call.1} parent=1 // loop_footer
      %s19 = sadd.s32 1, %s15
    $region7: #{tpu_custom_call.1} parent=1 // loop_footer_branch
      %14 = sbr.rel target = $region3
    $region8: #{tpu_custom_call.1} parent=1 // loop_exit
      _
    %422 = vsyncpa [#allocation3], 1
    %s423 = scalar_lea.sflag [#allocation3], 1
    %424 = vsyncpa %s423, 1
    %425 = vsyncpa [#allocation6], 1
    %s426 = scalar_lea.sflag [#allocation6], 1
    %427 = vsyncpa %s426, 1
    %428 = vsyncpa [#allocation4], 1
    %s429 = scalar_lea.sflag [#allocation4], 1
    %430 = vsyncpa %s429, 1

</llo_original>
